<compile_context>
chip_gen: v7x
topology: tpu7x:2x2x1
jax: 0.10.0
libtpu: 0.0.40
codegen_flags: <defaults>
</compile_context>

<pallas_src>
import jax
import jax.numpy as jnp
from jax.experimental import pallas as pl
from jax.experimental.pallas import tpu as pltpu

IN_FEATURES = 3
OUT_FEATURES = 2
N_PAD = 128           # weight columns padded to one lane tile (lane-dense dot)
TARGET_TILE_M = 1024  # rows per grid step; ~86% of measured mem-bound roofline


def _round_up(x: int, m: int) -> int:
    return ((x + m - 1) // m) * m


def linear_kernel(x_ref, w_ref, b_ref, o_ref):
    # (tile_m, 3) @ (3, 128) on the MXU; keep the 2 real columns, add bias.
    acc = jnp.dot(x_ref[...], w_ref[...], preferred_element_type=jnp.float32)
    o_ref[...] = acc[:, :OUT_FEATURES] + b_ref[...]


def init_params(weight, bias):
    """One-time prep of nn.Linear(3, 2) parameters.

    weight: (2, 3) f32 (PyTorch layout), bias: (2,) f32.
    Returns W^T lane-padded to (3, 128) (K is NOT padded) and bias as (1, 2).
    """
    w_t_pad = (
        jnp.zeros((IN_FEATURES, N_PAD), jnp.float32)
        .at[:, :OUT_FEATURES]
        .set(weight.T)
    )
    b2 = bias.reshape(1, OUT_FEATURES).astype(jnp.float32)
    return w_t_pad, b2


def linear_pallas(x, w_t_pad, b2):
    """Forward pass. x: (batch, 3) f32 (unpadded); params from init_params."""
    batch = x.shape[0]

    # Row tile: large enough for the HBM roofline, small enough that the
    # "parallel" grid axis has >= 2 steps on non-tiny batches (v7x has 2 TCs),
    # and >= 8 for sublane alignment.  The ragged last block is handled by
    # Pallas, so the wrapper never pads or copies the batch.
    tile_m = max(8, min(TARGET_TILE_M, _round_up(pl.cdiv(batch, 2), 8)))
    grid = (pl.cdiv(batch, tile_m),)

    return pl.pallas_call(
        linear_kernel,
        out_shape=jax.ShapeDtypeStruct((batch, OUT_FEATURES), jnp.float32),
        grid=grid,
        in_specs=[
            pl.BlockSpec((tile_m, IN_FEATURES), lambda i: (i, 0)),  # x rows (unpadded)
            pl.BlockSpec((IN_FEATURES, N_PAD), lambda i: (0, 0)),   # weight (resident)
            pl.BlockSpec((1, OUT_FEATURES), lambda i: (0, 0)),      # bias (resident)
        ],
        out_specs=pl.BlockSpec((tile_m, OUT_FEATURES), lambda i: (i, 0)),
        compiler_params=pltpu.CompilerParams(
            dimension_semantics=("parallel",),  # shard row tiles across v7x TCs
        ),
        cost_estimate=pl.CostEstimate(
            flops=2 * batch * IN_FEATURES * N_PAD,
            transcendentals=0,
            bytes_accessed=4 * (batch * IN_FEATURES          # x read
                                + IN_FEATURES * N_PAD        # weight read (once)
                                + OUT_FEATURES               # bias read (once)
                                + batch * OUT_FEATURES),     # y write (narrow)
        ),
    )(x, w_t_pad, b2)


if __name__ == "__main__":
    key = jax.random.PRNGKey(0)
    k_x, k_w, k_b = jax.random.split(key, 3)

    # Deterministic parameter init (shapes per nn.Linear(3, 2)): W (2,3), b (2,)
    bound = 1.0 / (IN_FEATURES ** 0.5)
    weight = jax.random.uniform(k_w, (OUT_FEATURES, IN_FEATURES),
                                minval=-bound, maxval=bound, dtype=jnp.float32)
    bias = jax.random.uniform(k_b, (OUT_FEATURES,),
                              minval=-bound, maxval=bound, dtype=jnp.float32)

    # Hoisted once (init time), reused for every forward call.
    w_t_pad, b2 = init_params(weight, bias)

    # Small shape consistent with the module: batch=2, features=3.
    batch = 2
    x = jax.random.normal(k_x, (batch, IN_FEATURES), dtype=jnp.float32)

    y = jax.block_until_ready(linear_pallas(x, w_t_pad, b2))
    y_ref = x @ weight.T + bias
    assert y.shape == (batch, OUT_FEATURES)
    assert jnp.allclose(y, y_ref, atol=1e-5, rtol=1e-5)

    # Exercise the multi-tile path with a ragged last block as well.
    x_big = jax.random.normal(jax.random.PRNGKey(1), (20, IN_FEATURES),
                              dtype=jnp.float32)
    y_big = jax.block_until_ready(linear_pallas(x_big, w_t_pad, b2))
    assert jnp.allclose(y_big, x_big @ weight.T + bias, atol=1e-5, rtol=1e-5)

    print("KERNEL_OK")
</pallas_src>

<mosaic_0001>
module attributes {stable_mosaic.version = 11 : i64} {
  func.func @linear_kernel(%arg0: i32, %arg1: memref<8x3xf32, #tpu.memory_space<vmem>>, %arg2: memref<3x128xf32, #tpu.memory_space<vmem>>, %arg3: memref<1x2xf32, #tpu.memory_space<vmem>>, %arg4: memref<8x2xf32, #tpu.memory_space<vmem>>) attributes {dimension_semantics = [#tpu.dimension_semantics<parallel>], iteration_bounds = array<i64: 1>, scalar_prefetch = 0 : i64, scratch_operands = 0 : i64, tpu.core_type = #tpu.core_type<tc>, window_params = [{transform_indices = @transform_0, window_bounds = array<i64: 8, 3>}, {pipeline_mode = #tpu.pipeline_mode<synchronous>, transform_indices = @transform_1, window_bounds = array<i64: 3, 128>}, {pipeline_mode = #tpu.pipeline_mode<synchronous>, transform_indices = @transform_2, window_bounds = array<i64: 1, 2>}, {transform_indices = @transform_3, window_bounds = array<i64: 8, 2>}]} {
    %c0 = arith.constant 0 : index
    %c0_0 = arith.constant 0 : index
    %0 = vector.load %arg1[%c0, %c0_0] : memref<8x3xf32, #tpu.memory_space<vmem>>, vector<8x3xf32>
    %c0_1 = arith.constant 0 : index
    %c0_2 = arith.constant 0 : index
    %1 = vector.load %arg2[%c0_1, %c0_2] : memref<3x128xf32, #tpu.memory_space<vmem>>, vector<3x128xf32>
    %cst = arith.constant dense<0.000000e+00> : vector<8x128xf32>
    %2 = tpu.matmul %0, %1, %cst {dimension_numbers = #tpu.dot_dimension_numbers<[1], [0], [0], [1], [0, 0, 1, 1], [], []>} : vector<8x3xf32>, vector<3x128xf32>, vector<8x128xf32> -> vector<8x128xf32>
    %3 = vector.extract_strided_slice %2 {offsets = [0, 0], sizes = [8, 2], strides = [1, 1]} : vector<8x128xf32> to vector<8x2xf32>
    %c0_3 = arith.constant 0 : index
    %c0_4 = arith.constant 0 : index
    %4 = vector.load %arg3[%c0_3, %c0_4] : memref<1x2xf32, #tpu.memory_space<vmem>>, vector<1x2xf32>
    %5 = vector.broadcast %4 : vector<1x2xf32> to vector<8x2xf32>
    %6 = arith.addf %3, %5 : vector<8x2xf32>
    %c0_5 = arith.constant 0 : index
    %c0_6 = arith.constant 0 : index
    %7 = vector.load %arg4[%c0_5, %c0_6] : memref<8x2xf32, #tpu.memory_space<vmem>>, vector<8x2xf32>
    tpu.vector_store %arg4[%c0_5, %c0_6], %6 {strides = array<i32>} : memref<8x2xf32, #tpu.memory_space<vmem>>, vector<8x2xf32>,
    return
  }
  func.func @transform_0(%arg0: i32) -> (i32, i32) {
    %c0_i32 = arith.constant 0 : i32
    %c0_i32_0 = arith.constant 0 : i32
    return %arg0, %c0_i32 : i32, i32
  }
  func.func @transform_1(%arg0: i32) -> (i32, i32) {
    %c0_i32 = arith.constant 0 : i32
    %c0_i32_0 = arith.constant 0 : i32
    %c0_i32_1 = arith.constant 0 : i32
    return %c0_i32, %c0_i32_0 : i32, i32
  }
  func.func @transform_2(%arg0: i32) -> (i32, i32) {
    %c0_i32 = arith.constant 0 : i32
    %c0_i32_0 = arith.constant 0 : i32
    %c0_i32_1 = arith.constant 0 : i32
    return %c0_i32, %c0_i32_0 : i32, i32
  }
  func.func @transform_3(%arg0: i32) -> (i32, i32) {
    %c0_i32 = arith.constant 0 : i32
    %c0_i32_0 = arith.constant 0 : i32
    return %arg0, %c0_i32 : i32, i32
  }
}

</mosaic_0001>

<llo_original>
// kernel: tpu_custom_call.1
$region0: #{tpu_custom_call.1}
  #allocation0 [shape = 'u32[]', space=smem, size = 0x4, offset = 0x4, fixed_abs, tag = 'smem constant byte address 0x4 - core index']
  #allocation1 [shape = 'u32[144,128]{1,0:T(1,128)}', space=vmem, size = 0x12000, scoped, tag = 'internal scratch']
  %s0 = inlined_call_operand.hbm [shape: f32[2,3], index: 0, kind: input, shape index: {}]
  %s1 = inlined_call_operand.hbm [shape: f32[3,128], index: 1, kind: input, shape index: {}]
  %s2 = inlined_call_operand.vmem [shape: f32[1,2], index: 2, kind: input, shape index: {}]
  %s3 = inlined_call_operand.hbm [shape: f32[2,2], index: 3, kind: output, shape index: {}]
  %s4 = sld [smem:[#allocation0]]
  $region30: #{tpu_custom_call.1} parent=0
    _
  %s6 = ssub.s32 1, %s4
  %s7 = scalar_select 0, %s6, %s4
  $region1: #{tpu_custom_call.1} parent=0
    #allocation2 [shape = 'u8[4096]{0}', space=vmem, size = 0x1000, scoped, tag = 'input window, operand 0, single buffered']
    #allocation3 [shape = 's32[1]{0}', space=sflag, size = 0x4, scoped, tag = 'scoped memory for tpu_custom_call.1']
    #allocation4 [shape = 's32[1]{0}', space=sflag, size = 0x4, scoped, tag = 'scoped memory for tpu_custom_call.1']
    #allocation5 [shape = 'u8[2048]{0}', space=vmem, size = 0x800, scoped, tag = 'input window, operand 1, single buffered']
    #allocation6 [shape = 's32[1]{0}', space=sflag, size = 0x4, scoped, tag = 'scoped memory for tpu_custom_call.1']
    #allocation7 [shape = 'u8[4096]{0}', space=vmem, size = 0x1000, scoped, tag = 'output window, operand 0, single buffered']
    %8 = vsyncpa [#allocation3], 0
    %9 = vsyncpa [#allocation6], 0
    %10 = vsyncpa [#allocation4], 0
    // Predicated region
    $region2: #{tpu_custom_call.1} parent=1 // pred_check
      _
    $region3: #{tpu_custom_call.1} parent=1 // pred_check_branch
      %12 = sbr.rel (0) target = $region5
    $region4: #{tpu_custom_call.1} parent=1 // pred_region
      %s14 = ssub.s32 128, 32
      %15 = vsyncadd [#allocation3], %s14
      %s16 = sshll.u32 [#allocation2], 4
      %s17 = int_to_ptr.vmem [resolvable:$true] %s16
      %22 = dma.hbm_to_vmem [thread:$0]  %s0, 32, %s17, [#allocation3], 32, 32, 2
    $region5: #{tpu_custom_call.1} parent=1 // pred_fallthru
      _
    // Predicated region
    $region6: #{tpu_custom_call.1} parent=1 // pred_check
      _
    $region7: #{tpu_custom_call.1} parent=1 // pred_check_branch
      %24 = sbr.rel (0) target = $region9
    $region8: #{tpu_custom_call.1} parent=1 // pred_region
      %s26 = ssub.s32 64, 64
      %27 = vsyncadd [#allocation6], %s26
      %s29 = sshll.u32 [#allocation5], 4
      %s30 = int_to_ptr.vmem [resolvable:$true] %s29
      %32 = dma.hbm_to_vmem [thread:$0]  %s1, 64, %s30, [#allocation6]
    $region9: #{tpu_custom_call.1} parent=1 // pred_fallthru
      _
    // Predicated region
    $region10: #{tpu_custom_call.1} parent=1 // pred_check
      _
    $region11: #{tpu_custom_call.1} parent=1 // pred_check_branch
      %34 = sbr.rel (0) target = $region13
    $region12: #{tpu_custom_call.1} parent=1 // pred_region
      _
    $region13: #{tpu_custom_call.1} parent=1 // pred_fallthru
      _
    // Predicated region
    $region14: #{tpu_custom_call.1} parent=1 // pred_check
      _
    $region15: #{tpu_custom_call.1} parent=1 // pred_check_branch
      %36 = sbr.rel (0) target = $region17
    $region16: #{tpu_custom_call.1} parent=1 // pred_region
      %37 = dma.done [#allocation3], 128
    $region17: #{tpu_custom_call.1} parent=1 // pred_fallthru
      _
    // Predicated region
    $region18: #{tpu_custom_call.1} parent=1 // pred_check
      _
    $region19: #{tpu_custom_call.1} parent=1 // pred_check_branch
      %39 = sbr.rel (0) target = $region21
    $region20: #{tpu_custom_call.1} parent=1 // pred_region
      %40 = dma.done [#allocation6], 64
    $region21: #{tpu_custom_call.1} parent=1 // pred_fallthru
      _
    %v41 = vld [vmem:[#allocation2] sm:$0xff]
    %v42 = vld [vmem:[#allocation5] sm:$0x7]
    %vm43 = vcmask 23552
    %v45 = vsel %vm43, %v41, 0
    %vm47 = vcmask 1042432
    %v49 = vsel %vm47, %v42, 0
    %51 = vmatprep.subr.mxu0 0.0
    %52 = vmatpush1.msra.mxu0 %v49
    %53 = vmatprep.subr.mxu0 0.0
    %54 = vmatpush1.msra.mxu0 0.0
    %55 = vmatprep.subr.mxu0 0.0
    %56 = vmatpush1.msra.mxu0 0.0
    %57 = vmatprep.subr.mxu0 0.0
    %58 = vmatpush1.msra.mxu0 0.0
    %59 = vmatprep.subr.mxu0 0.0
    %60 = vmatpush1.msra.mxu0 0.0
    %61 = vmatprep.subr.mxu0 0.0
    %62 = vmatpush1.msra.mxu0 0.0
    %63 = vmatprep.subr.mxu0 0.0
    %64 = vmatpush1.msra.mxu0 0.0
    %65 = vmatprep.subr.mxu0 0.0
    %66 = vmatpush1.msra.mxu0 0.0
    %67 = vmatprep.subr.mxu0 0.0
    %68 = vmatpush1.msra.mxu0 0.0
    %69 = vmatprep.subr.mxu0 0.0
    %70 = vmatpush1.msra.mxu0 0.0
    %71 = vmatprep.subr.mxu0 0.0
    %72 = vmatpush1.msra.mxu0 0.0
    %73 = vmatprep.subr.mxu0 0.0
    %74 = vmatpush1.msra.mxu0 0.0
    %75 = vmatprep.subr.mxu0 0.0
    %76 = vmatpush1.msra.mxu0 0.0
    %77 = vmatprep.subr.mxu0 0.0
    %78 = vmatpush1.msra.mxu0 0.0
    %79 = vmatprep.subr.mxu0 0.0
    %80 = vmatpush1.msra.mxu0 0.0
    %81 = vmatprep.subr.mxu0 0.0
    %82 = vmatpush1.msra.mxu0 0.0
    %83 = vmatprep.subr.mxu0 0.0
    %84 = vmatpush1.msra.mxu0 0.0
    %85 = vmatprep.subr.mxu0 0.0
    %86 = vmatpush1.msra.mxu0 0.0
    %87 = vmatprep.subr.mxu0 0.0
    %88 = vmatpush1.msra.mxu0 0.0
    %89 = vmatprep.subr.mxu0 0.0
    %90 = vmatpush1.msra.mxu0 0.0
    %91 = vmatprep.subr.mxu0 0.0
    %92 = vmatpush1.msra.mxu0 0.0
    %93 = vmatprep.subr.mxu0 0.0
    %94 = vmatpush1.msra.mxu0 0.0
    %95 = vmatprep.subr.mxu0 0.0
    %96 = vmatpush1.msra.mxu0 0.0
    %97 = vmatprep.subr.mxu0 0.0
    %98 = vmatpush1.msra.mxu0 0.0
    %99 = vmatprep.subr.mxu0 0.0
    %100 = vmatpush1.msra.mxu0 0.0
    %101 = vmatprep.subr.mxu0 0.0
    %102 = vmatpush1.msra.mxu0 0.0
    %103 = vmatprep.subr.mxu0 0.0
    %104 = vmatpush1.msra.mxu0 0.0
    %105 = vmatprep.subr.mxu0 0.0
    %106 = vmatpush1.msra.mxu0 0.0
    %107 = vmatprep.subr.mxu0 0.0
    %108 = vmatpush1.msra.mxu0 0.0
    %109 = vmatprep.subr.mxu0 0.0
    %110 = vmatpush1.msra.mxu0 0.0
    %111 = vmatprep.subr.mxu0 0.0
    %112 = vmatpush1.msra.mxu0 0.0
    %113 = vmatprep.subr.mxu0 0.0
    %114 = vmatpush1.msra.mxu0 0.0
    %115 = vmatprep.mubr.f32.mxu0 0.0
    %116 = vmatmul.mubr.f32.gmra.mrb[0].mxu0 %v45
    %v117 = vpop.f32.mrb[0].mxu0
    %v118 = vadd.f32 0.0, %v117
    %v119 = vpop.f32.mrb[0].mxu0
    %120 = vdwg.mxu0
    %v121 = vld [vmem:[%s2] sm:$0x1]
    %v123 = vlaneseq
    %v124 = vshrl.u32 %v123, 7
    %v125 = vsub.s32 0, %v124
    %v126 = vrot.slane %v121, %v125
    %v128 = vadd.f32 %v118, %v126
    %vm129 = vcmask 15360
    %130 = vst.msk [vmem:[#allocation7] sm:$0xff] %vm129, %v128
    // Predicated region
    $region22: #{tpu_custom_call.1} parent=1 // pred_check
      _
    $region23: #{tpu_custom_call.1} parent=1 // pred_check_branch
      %132 = sbr.rel (0) target = $region25
    $region24: #{tpu_custom_call.1} parent=1 // pred_region
      %s134 = ssub.s32 128, 32
      %135 = vsyncadd [#allocation4], %s134
      %s136 = sshll.u32 [#allocation7], 4
      %s137 = int_to_ptr.vmem [resolvable:$true] %s136
      %142 = dma.vmem_to_hbm [thread:$0]  %s137, 32, %s3, [#allocation4], 32, 32, 2
    $region25: #{tpu_custom_call.1} parent=1 // pred_fallthru
      _
    // Predicated region
    $region26: #{tpu_custom_call.1} parent=1 // pred_check
      _
    $region27: #{tpu_custom_call.1} parent=1 // pred_check_branch
      %144 = sbr.rel (0) target = $region29
    $region28: #{tpu_custom_call.1} parent=1 // pred_region
      %145 = dma.done [#allocation4], 128
    $region29: #{tpu_custom_call.1} parent=1 // pred_fallthru
      _
    %146 = vsyncpa [#allocation3], 1
    %147 = vsyncpa [#allocation6], 1
    %148 = vsyncpa [#allocation4], 1

</llo_original>
